<compile_context>
chip_gen: v5e
topology: v5e:2x2
jax: 0.10.0
libtpu: 0.0.40
codegen_flags: <defaults>
</compile_context>

<pallas_src>
import jax
import jax.numpy as jnp
from jax.experimental import pallas as pl
from jax.experimental.pallas import tpu as pltpu


def _round_up(a, b):
    return (a + b - 1) // b * b


def _make_prenorm_kernel(fn, hw_valid, hw_pad, block_rows, eps):
    """Build the fused instance-norm + fn kernel (all sizes static)."""
    need_mask = hw_pad != hw_valid
    inv_n = 1.0 / float(hw_valid)

    def kernel(x_ref, g_ref, b_ref, o_ref):
        i = pl.program_id(0)
        x = x_ref[...].astype(jnp.float32)            # (block_rows, hw_pad)

        if need_mask:
            lane = jax.lax.broadcasted_iota(jnp.int32, x.shape, dimension=1)
            valid = lane < hw_valid
            xs = jnp.where(valid, x, 0.0)
        else:
            xs = x

        mean = jnp.sum(xs, axis=-1, keepdims=True) * inv_n
        xc = x - mean
        xc_v = jnp.where(valid, xc, 0.0) if need_mask else xc
        # InstanceNorm uses the biased (population) variance.
        var = jnp.sum(xc_v * xc_v, axis=-1, keepdims=True) * inv_n
        inv_std = jax.lax.rsqrt(var + eps)

        # Per-row affine params sliced out of the resident (NC_pad, 1) tables.
        row0 = pl.multiple_of(i * block_rows, block_rows)
        g = g_ref[pl.ds(row0, block_rows), :]
        b = b_ref[pl.ds(row0, block_rows), :]

        y = xc * inv_std * g + b
        if need_mask:
            y = jnp.where(valid, y, 0.0)
        y = fn(y)                                     # fused elementwise wrapped fn
        o_ref[...] = y.astype(o_ref.dtype)

    return kernel


def pre_norm(x, weight, bias, fn=jax.nn.gelu, *, eps=1e-5):
    """PreNorm.forward: fn(InstanceNorm2d(x)), fused in one Pallas kernel.

    x: (N, C, H, W); weight/bias: (C,). `fn` must be an elementwise, JAX-traceable
    function to be fused (GELU, SiLU, ...).
    """
    N, C, H, W = x.shape
    NC, HW = N * C, H * W

    sublane = 16 if x.dtype == jnp.bfloat16 else 8
    hw_pad = max(128, _round_up(HW, 128))             # lane-dense output

    # ---- VMEM budget / tile-size selection (chip-aware) --------------------
    try:
        vmem_cap = int(getattr(pltpu.get_tpu_info(), "vmem_capacity_bytes", 64 << 20))
    except Exception:
        vmem_cap = 64 << 20                           # conservative (v7x-sized) fallback
    vmem_limit = int(min(vmem_cap // 2, 64 << 20))    # 64 MiB on v5e/v6e, 32 MiB on v7x
    budget = vmem_limit // 2                          # headroom for pipeline/compiler scratch

    # Per-row live bytes: double-buffered in + out tiles plus the f32 working copy.
    bytes_per_row = hw_pad * (4 * x.dtype.itemsize + 8)
    br_budget = max(sublane, (budget // bytes_per_row) // sublane * sublane)
    br_target = max(sublane, ((2 << 20) // (hw_pad * 4)) // sublane * sublane)  # ~2 MiB f32 tile
    block_rows = int(min(br_budget, br_target, _round_up(NC, sublane)))
    block_rows = max(sublane, block_rows // sublane * sublane)

    nc_pad = _round_up(NC, block_rows)
    grid = (nc_pad // block_rows,)

    # ---- Pad inputs (padded rows/lanes are computed then discarded) --------
    x2 = x.reshape(NC, HW)
    if nc_pad != NC or hw_pad != HW:
        x2 = jnp.pad(x2, ((0, nc_pad - NC), (0, hw_pad - HW)))

    g = jnp.broadcast_to(weight.astype(jnp.float32)[None, :], (N, C)).reshape(NC, 1)
    b = jnp.broadcast_to(bias.astype(jnp.float32)[None, :], (N, C)).reshape(NC, 1)
    if nc_pad != NC:
        g = jnp.pad(g, ((0, nc_pad - NC), (0, 0)), constant_values=1.0)
        b = jnp.pad(b, ((0, nc_pad - NC), (0, 0)))

    kernel = _make_prenorm_kernel(fn, HW, hw_pad, block_rows, eps)

    y2 = pl.pallas_call(
        kernel,
        out_shape=jax.ShapeDtypeStruct((nc_pad, hw_pad), x.dtype),
        grid_spec=pltpu.PrefetchScalarGridSpec(
            num_scalar_prefetch=0,
            grid=grid,
            in_specs=[
                pl.BlockSpec((block_rows, hw_pad), lambda i: (i, 0)),
                pl.BlockSpec((nc_pad, 1), lambda i: (0, 0)),   # resident affine gain
                pl.BlockSpec((nc_pad, 1), lambda i: (0, 0)),   # resident affine bias
            ],
            out_specs=pl.BlockSpec((block_rows, hw_pad), lambda i: (i, 0)),
        ),
        compiler_params=pltpu.CompilerParams(
            dimension_semantics=("parallel",),     # lets v7x shard row-blocks across 2 TCs
            vmem_limit_bytes=vmem_limit,
        ),
    )(x2, g, b)

    y2 = y2[:NC, :HW]
    return y2.reshape(N, C, H, W)


def _reference(x, weight, bias, fn):
    xf = x.astype(jnp.float32)
    mean = jnp.mean(xf, axis=(2, 3), keepdims=True)
    var = jnp.mean((xf - mean) ** 2, axis=(2, 3), keepdims=True)
    y = (xf - mean) * jax.lax.rsqrt(var + 1e-5)
    y = y * weight[None, :, None, None] + bias[None, :, None, None]
    return fn(y.astype(x.dtype))


if __name__ == "__main__":
    key = jax.random.PRNGKey(0)
    kx, kw, kb = jax.random.split(key, 3)

    N, C, H, W = 2, 4, 16, 16
    x = jax.random.normal(kx, (N, C, H, W), dtype=jnp.float32)

    # Deterministic affine params (random so the affine path is exercised).
    weight = jax.random.normal(kw, (C,), dtype=jnp.float32)
    bias = jax.random.normal(kb, (C,), dtype=jnp.float32)

    # The wrapped `fn` (arbitrary elementwise sub-module) — fused into the kernel.
    fn = jax.nn.gelu

    out = pre_norm(x, weight, bias, fn)
    out = jax.block_until_ready(out)

    ref = _reference(x, weight, bias, fn)
    assert out.shape == (N, C, H, W)
    assert jnp.allclose(out, ref, rtol=1e-4, atol=1e-4), "mismatch vs reference"

    print("KERNEL_OK")
</pallas_src>

<mosaic_0001>
module attributes {stable_mosaic.version = 11 : i64} {
  func.func @kernel(%arg0: i32, %arg1: memref<8x256xf32, #tpu.memory_space<vmem>>, %arg2: memref<8x1xf32, #tpu.memory_space<vmem>>, %arg3: memref<8x1xf32, #tpu.memory_space<vmem>>, %arg4: memref<8x256xf32, #tpu.memory_space<vmem>>) attributes {dimension_semantics = [#tpu.dimension_semantics<parallel>], iteration_bounds = array<i64: 1>, scalar_prefetch = 0 : i64, scratch_operands = 0 : i64, tpu.core_type = #tpu.core_type<tc>, window_params = [{transform_indices = @transform_0, window_bounds = array<i64: 8, 256>}, {pipeline_mode = #tpu.pipeline_mode<synchronous>, transform_indices = @transform_1, window_bounds = array<i64: 8, 1>}, {pipeline_mode = #tpu.pipeline_mode<synchronous>, transform_indices = @transform_2, window_bounds = array<i64: 8, 1>}, {transform_indices = @transform_3, window_bounds = array<i64: 8, 256>}]} {
    %c0 = arith.constant 0 : index
    %c0_0 = arith.constant 0 : index
    %0 = vector.load %arg1[%c0, %c0_0] : memref<8x256xf32, #tpu.memory_space<vmem>>, vector<8x256xf32>
    %cst = arith.constant dense<0.000000e+00> : vector<8xf32>
    %1 = vector.multi_reduction <add>, %0, %cst [1] : vector<8x256xf32> to vector<8xf32>
    %2 = vector.shape_cast %1 : vector<8xf32> to vector<8x1xf32>
    %cst_1 = arith.constant 3.906250e-03 : f32
    %3 = vector.broadcast %cst_1 : f32 to vector<8x1xf32>
    %4 = arith.mulf %2, %3 : vector<8x1xf32>
    %5 = vector.broadcast %4 : vector<8x1xf32> to vector<8x256xf32>
    %6 = arith.subf %0, %5 : vector<8x256xf32>
    %7 = arith.mulf %6, %6 : vector<8x256xf32>
    %cst_2 = arith.constant dense<0.000000e+00> : vector<8xf32>
    %8 = vector.multi_reduction <add>, %7, %cst_2 [1] : vector<8x256xf32> to vector<8xf32>
    %9 = vector.shape_cast %8 : vector<8xf32> to vector<8x1xf32>
    %cst_3 = arith.constant 3.906250e-03 : f32
    %10 = vector.broadcast %cst_3 : f32 to vector<8x1xf32>
    %11 = arith.mulf %9, %10 : vector<8x1xf32>
    %cst_4 = arith.constant 9.99999974E-6 : f32
    %12 = vector.broadcast %cst_4 : f32 to vector<8x1xf32>
    %13 = arith.addf %11, %12 : vector<8x1xf32>
    %14 = math.rsqrt %13 : vector<8x1xf32>
    %c8_i32 = arith.constant 8 : i32
    %15 = arith.muli %arg0, %c8_i32 : i32
    %16 = tpu.assume_multiple %15, 8 : i32
    %17 = arith.index_cast %16 : i32 to index
    %c0_5 = arith.constant 0 : index
    %18 = vector.load %arg2[%17, %c0_5] : memref<8x1xf32, #tpu.memory_space<vmem>>, vector<8x1xf32>
    %19 = arith.index_cast %16 : i32 to index
    %c0_6 = arith.constant 0 : index
    %20 = vector.load %arg3[%19, %c0_6] : memref<8x1xf32, #tpu.memory_space<vmem>>, vector<8x1xf32>
    %21 = vector.broadcast %14 : vector<8x1xf32> to vector<8x256xf32>
    %22 = arith.mulf %6, %21 : vector<8x256xf32>
    %23 = vector.broadcast %18 : vector<8x1xf32> to vector<8x256xf32>
    %24 = arith.mulf %22, %23 : vector<8x256xf32>
    %25 = vector.broadcast %20 : vector<8x1xf32> to vector<8x256xf32>
    %26 = arith.addf %24, %25 : vector<8x256xf32>
    %27 = arith.mulf %26, %26 : vector<8x256xf32>
    %28 = arith.mulf %26, %27 : vector<8x256xf32>
    %cst_7 = arith.constant 4.471500e-02 : f32
    %29 = vector.broadcast %cst_7 : f32 to vector<8x256xf32>
    %30 = arith.mulf %29, %28 : vector<8x256xf32>
    %31 = arith.addf %26, %30 : vector<8x256xf32>
    %cst_8 = arith.constant 0.797884583 : f32
    %32 = vector.broadcast %cst_8 : f32 to vector<8x256xf32>
    %33 = arith.mulf %32, %31 : vector<8x256xf32>
    %34 = math.tanh %33 : vector<8x256xf32>
    %cst_9 = arith.constant 1.000000e+00 : f32
    %35 = vector.broadcast %cst_9 : f32 to vector<8x256xf32>
    %36 = arith.addf %35, %34 : vector<8x256xf32>
    %cst_10 = arith.constant 5.000000e-01 : f32
    %37 = vector.broadcast %cst_10 : f32 to vector<8x256xf32>
    %38 = arith.mulf %37, %36 : vector<8x256xf32>
    %39 = arith.mulf %26, %38 : vector<8x256xf32>
    %c0_11 = arith.constant 0 : index
    %c0_12 = arith.constant 0 : index
    %40 = vector.load %arg4[%c0_11, %c0_12] : memref<8x256xf32, #tpu.memory_space<vmem>>, vector<8x256xf32>
    tpu.vector_store %arg4[%c0_11, %c0_12], %39 {strides = array<i32>} : memref<8x256xf32, #tpu.memory_space<vmem>>, vector<8x256xf32>,
    return
  }
  func.func @transform_0(%arg0: i32) -> (i32, i32) {
    %c0_i32 = arith.constant 0 : i32
    %c0_i32_0 = arith.constant 0 : i32
    return %arg0, %c0_i32 : i32, i32
  }
  func.func @transform_1(%arg0: i32) -> (i32, i32) {
    %c0_i32 = arith.constant 0 : i32
    %c0_i32_0 = arith.constant 0 : i32
    %c0_i32_1 = arith.constant 0 : i32
    return %c0_i32, %c0_i32_0 : i32, i32
  }
  func.func @transform_2(%arg0: i32) -> (i32, i32) {
    %c0_i32 = arith.constant 0 : i32
    %c0_i32_0 = arith.constant 0 : i32
    %c0_i32_1 = arith.constant 0 : i32
    return %c0_i32, %c0_i32_0 : i32, i32
  }
  func.func @transform_3(%arg0: i32) -> (i32, i32) {
    %c0_i32 = arith.constant 0 : i32
    %c0_i32_0 = arith.constant 0 : i32
    return %arg0, %c0_i32 : i32, i32
  }
}

</mosaic_0001>

<llo_original>
// kernel: tpu_custom_call.1
$region0: #{tpu_custom_call.1}
  #allocation0 [shape = 'u32[]', space=smem, size = 0x4, offset = 0x4, fixed_abs, tag = 'smem constant byte address 0x4 - core index']
  #allocation1 [shape = 'u32[72,128]{1,0:T(1,128)}', space=vmem, size = 0x9000, scoped, tag = 'internal scratch']
  %s0 = inlined_call_operand.vmem [shape: f32[8,256], index: 0, kind: input, shape index: {}]
  %s1 = inlined_call_operand.vmem [shape: f32[8,1], index: 1, kind: input, shape index: {}]
  %s2 = inlined_call_operand.vmem [shape: f32[8,1], index: 2, kind: input, shape index: {}]
  %s3 = inlined_call_operand.hbm [shape: f32[8,256], index: 3, kind: output, shape index: {}]
  %s4 = sld [smem:[#allocation0]]
  $region22: #{tpu_custom_call.1} parent=0
    _
  %s6 = ssub.s32 1, %s4
  %s7 = scalar_select 0, %s6, %s4
  $region1: #{tpu_custom_call.1} parent=0
    #allocation2 [shape = 'u8[8192]{0}', space=vmem, size = 0x2000, scoped, tag = 'output window, operand 0, single buffered']
    #allocation3 [shape = 's32[1]{0}', space=sflag, size = 0x4, scoped, tag = 'scoped memory for tpu_custom_call.1']
    %8 = vsyncpa [#allocation3], 0
    // Predicated region
    $region2: #{tpu_custom_call.1} parent=1 // pred_check
      _
    $region3: #{tpu_custom_call.1} parent=1 // pred_check_branch
      %10 = sbr.rel (0) target = $region5
    $region4: #{tpu_custom_call.1} parent=1 // pred_region
      _
    $region5: #{tpu_custom_call.1} parent=1 // pred_fallthru
      _
    // Predicated region
    $region6: #{tpu_custom_call.1} parent=1 // pred_check
      _
    $region7: #{tpu_custom_call.1} parent=1 // pred_check_branch
      %12 = sbr.rel (0) target = $region9
    $region8: #{tpu_custom_call.1} parent=1 // pred_region
      _
    $region9: #{tpu_custom_call.1} parent=1 // pred_fallthru
      _
    // Predicated region
    $region10: #{tpu_custom_call.1} parent=1 // pred_check
      _
    $region11: #{tpu_custom_call.1} parent=1 // pred_check_branch
      %14 = sbr.rel (0) target = $region13
    $region12: #{tpu_custom_call.1} parent=1 // pred_region
      _
    $region13: #{tpu_custom_call.1} parent=1 // pred_fallthru
      _
    %v15 = vld [vmem:[%s0] sm:$0xff]
    %v16 = vld [vmem:[%s0 + $0x8] sm:$0xff]
    %v17 = vadd.f32 %v15, %v16
    %18 = vadd.xlane.f32.xlu0 %v17
    %v19 = vpop.xlane.xlu0 %18
    %v20 = vmul.f32 %v19, 0.00390625
    %v21 = vsub.f32 %v15, %v20
    %v22 = vsub.f32 %v16, %v20
    %v23 = vmul.f32 %v21, %v21
    %v24 = vmul.f32 %v22, %v22
    %v25 = vadd.f32 %v23, %v24
    %26 = vadd.xlane.f32.xlu0 %v25
    %v27 = vpop.xlane.xlu0 %26
    %v28 = vmul.f32 %v27, 0.00390625
    %v29 = vadd.f32 %v28, 1e-05
    %v30 = vrsqrt.pop %v29
    %v31 = vmul.f32 %v30, %v29
    %v32 = vmul.f32 %v31, %v30
    %v33 = vmul.f32 0.5, %v32
    %v34 = vsub.f32 1.5, %v33
    %v35 = vmul.f32 %v30, %v34
    %vm36 = vweird.f32 %v29
    %vm37 = vweird.f32 %v30
    %vm38 = vmor %vm36, %vm37
    %v39 = vsel %vm38, %v30, %v35
    %s40 = smul.u32 0, 8
    %s41 = scalar_lea.vmem %s1, %s40
    %v42 = vld [vmem:[%s41] sm:$0xff]
    %s43 = scalar_lea.vmem %s2, %s40
    %v44 = vld [vmem:[%s43] sm:$0xff]
    %v45 = vmul.f32 %v21, %v39
    %v46 = vmul.f32 %v22, %v39
    %48 = vset.pattern.permute.xlu0 0
    %49 = vperm.xlu0 %48, %v42
    %v50 = vpop.permute.xlu0 %49
    %v52 = vmul.f32 %v45, %v50
    %v53 = vmul.f32 %v46, %v50
    %55 = vset.pattern.permute.xlu0 0
    %56 = vperm.xlu0 %55, %v44
    %v57 = vpop.permute.xlu0 %56
    %v59 = vadd.f32 %v52, %v57
    %v60 = vadd.f32 %v53, %v57
    %v61 = vmul.f32 %v59, %v59
    %v62 = vmul.f32 %v60, %v60
    %v63 = vmul.f32 %v59, %v61
    %v64 = vmul.f32 %v60, %v62
    %v65 = vmul.f32 %v63, 0.044715
    %v66 = vmul.f32 %v64, 0.044715
    %v67 = vadd.f32 %v59, %v65
    %v68 = vadd.f32 %v60, %v66
    %v69 = vmul.f32 %v67, 0.7978846
    %v70 = vmul.f32 %v68, 0.7978846
    %v71 = vtanh.pop %v69
    %v72 = vtanh.pop %v70
    %v73 = vadd.f32 %v71, 1.0
    %v74 = vadd.f32 %v72, 1.0
    %v75 = vmul.f32 %v73, 0.5
    %v76 = vmul.f32 %v74, 0.5
    %v77 = vmul.f32 %v59, %v75
    %v78 = vmul.f32 %v60, %v76
    %79 = vst [vmem:[#allocation2] sm:$0xff] %v77
    %80 = vst [vmem:[#allocation2 + $0x8] sm:$0xff] %v78
    // Predicated region
    $region14: #{tpu_custom_call.1} parent=1 // pred_check
      _
    $region15: #{tpu_custom_call.1} parent=1 // pred_check_branch
      %82 = sbr.rel (0) target = $region17
    $region16: #{tpu_custom_call.1} parent=1 // pred_region
      %84 = vsyncadd [#allocation3], 0
      %s86 = sshll.u32 [#allocation2], 4
      %s87 = int_to_ptr.vmem [resolvable:$true] %s86
      %s88 = sshll.u32 %s3, 4
      %s89 = int_to_ptr.hbm [resolvable:$true] %s88
      %91 = dma.vmem_to_hbm [thread:$0]  %s87, 256, %s89, [#allocation3]
    $region17: #{tpu_custom_call.1} parent=1 // pred_fallthru
      _
    // Predicated region
    $region18: #{tpu_custom_call.1} parent=1 // pred_check
      _
    $region19: #{tpu_custom_call.1} parent=1 // pred_check_branch
      %93 = sbr.rel (0) target = $region21
    $region20: #{tpu_custom_call.1} parent=1 // pred_region
      %95 = dma.done [#allocation3], 256
    $region21: #{tpu_custom_call.1} parent=1 // pred_fallthru
      _
    %96 = vsyncpa [#allocation3], 1

</llo_original>
